<compile_context>
chip_gen: v7x
topology: tpu7x:2x2x1
jax: 0.10.0
libtpu: 0.0.40
codegen_flags: <defaults>
</compile_context>

<pallas_src>
import functools

import jax
import jax.numpy as jnp
from jax.experimental import pallas as pl
from jax.experimental.pallas import tpu as pltpu


def _ce_label_smooth_kernel(logits_ref, targets_ref, partial_ref, *,
                            epsilon, num_classes, batch, block_b, mask_last):
    # logits_ref: (TB, C) input dtype, targets_ref: (TB, 1) int32,
    # partial_ref: (1, 128) f32 per-tile partial sum (lane-broadcast).
    i = pl.program_id(0)
    c = float(num_classes)

    x = logits_ref[...]                                   # (TB, C) input dtype
    t = targets_ref[...]                                   # (TB, 1) int32

    # Row max in the input dtype (bf16 VPU-native on v6e/v7x).
    m = jnp.max(x, axis=1, keepdims=True)                  # (TB, 1)
    mf = m.astype(jnp.float32)

    # Target logit via one masked row reduce (compare mask only, no onehot).
    col = jax.lax.broadcasted_iota(jnp.int32, x.shape, 1)
    tgt_x = jnp.sum(jnp.where(col == t, x, jnp.zeros_like(x)),
                    axis=1, keepdims=True, dtype=jnp.float32)   # (TB, 1) f32

    # Row sum of raw logits with f32 accumulation (single pass over x).
    sum_x = jnp.sum(x, axis=1, keepdims=True, dtype=jnp.float32)  # (TB, 1)

    # log-sum-exp: `shifted` lives only inside the fused exp input.
    exp_sum = jnp.sum(jnp.exp((x - m).astype(jnp.float32)),
                      axis=1, keepdims=True)                    # (TB, 1) f32
    lse = jnp.log(exp_sum)

    tgt_shifted = tgt_x - mf                                    # x[b, t_b] - m_b
    sum_shifted = sum_x - c * mf                                # sum_c shifted

    row_loss = -((1.0 - epsilon) * (tgt_shifted - lse)
                 + (epsilon / c) * (sum_shifted - c * lse))     # (TB, 1) f32

    def _write(vals):
        partial_ref[...] = jnp.full(partial_ref.shape, jnp.sum(vals),
                                    dtype=jnp.float32)

    if mask_last:
        last = pl.num_programs(0) - 1

        @pl.when(i == last)
        def _():
            row = (jax.lax.broadcasted_iota(jnp.int32, row_loss.shape, 0)
                   + i * block_b)
            # Keep this a select (not a multiply): padded rows may be NaN/Inf.
            _write(jnp.where(row < batch, row_loss, 0.0))

        @pl.when(i != last)
        def _():
            _write(row_loss)
    else:
        _write(row_loss)


def _round_up(x, m):
    return ((x + m - 1) // m) * m


def _choose_block_b(batch, num_classes, itemsize,
                    logits_vmem_budget=20 * 1024 * 1024,
                    max_block=4096):
    """Batch-tile size from a v7x-safe VMEM budget for the double-buffered logits."""
    bytes_per_row = max(num_classes, 128) * itemsize        # lane padding for C<128
    max_rows = logits_vmem_budget // (2 * bytes_per_row)    # 2 = double buffering
    max_rows = max(8, min(max_block, (max_rows // 8) * 8))
    if batch <= max_rows and batch <= 512:
        return batch                                        # small batch: one tile
    # Medium/large batch: an even number of roughly-equal tiles (2 v7x TCs),
    # bounded by the VMEM-derived maximum tile.
    n_tiles = _round_up(max(2, pl.cdiv(batch, max_rows)), 2)
    return min(max_rows, _round_up(pl.cdiv(batch, n_tiles), 8))


def cross_entropy_label_smooth(logits, targets, *, num_classes, epsilon,
                               block_b=None):
    """logits: (B, C) float (f32/bf16), targets: (B,) int -> scalar f32 loss."""
    B, C = logits.shape
    assert C == num_classes
    itemsize = jnp.dtype(logits.dtype).itemsize

    tb = block_b if block_b is not None else _choose_block_b(B, C, itemsize)
    tb = int(min(tb, B))
    num_tiles = pl.cdiv(B, tb)
    mask_last = (B % tb) != 0

    targets2d = targets.astype(jnp.int32).reshape(B, 1)

    kernel = functools.partial(
        _ce_label_smooth_kernel,
        epsilon=float(epsilon),
        num_classes=int(num_classes),
        batch=int(B),
        block_b=int(tb),
        mask_last=bool(mask_last),
    )

    # Lane-sparse C: deepen the logits pipeline to hide per-step overhead.
    if C < 128 and num_tiles >= 3:
        n_buf = 3
        logits_spec = pl.BlockSpec((tb, C), lambda i: (i, 0),
                                   pipeline_mode=pl.Buffered(3))
    else:
        n_buf = 2
        logits_spec = pl.BlockSpec((tb, C), lambda i: (i, 0))

    # VMEM limit derived from the actual working set (+ headroom), clamped so a
    # default-chosen tile stays <= ~32 MiB (v7x-safe) but never below 16 MiB.
    logits_bytes = n_buf * tb * max(C, 128) * itemsize
    misc_bytes = n_buf * tb * 128 * 4 + 2 * 8 * 128 * 4     # targets + output tiles
    vmem_limit = int(min(64 * 1024 * 1024,
                         max(16 * 1024 * 1024,
                             int(1.5 * (logits_bytes + misc_bytes)) + (2 << 20))))

    partials = pl.pallas_call(
        kernel,
        out_shape=jax.ShapeDtypeStruct((num_tiles, 128), jnp.float32),
        grid_spec=pl.GridSpec(
            grid=(num_tiles,),
            in_specs=[
                logits_spec,                                   # logits tile -> VMEM
                pl.BlockSpec((tb, 1), lambda i: (i, 0)),       # targets tile -> VMEM
            ],
            out_specs=pl.BlockSpec((1, 128), lambda i: (i, 0)),
        ),
        compiler_params=pltpu.CompilerParams(
            dimension_semantics=("parallel",),
            vmem_limit_bytes=vmem_limit,
        ),
    )(logits, targets2d)

    # Tiny final reduction across tiles + mean over the batch in plain JAX.
    return jnp.sum(partials[:, 0]) / jnp.float32(B)


def _reference(logits, targets, num_classes, epsilon):
    # Pure-JAX reference mirroring the PyTorch forward.
    log_probs = jax.nn.log_softmax(logits.astype(jnp.float32), axis=1)
    onehot = jax.nn.one_hot(targets, num_classes, dtype=jnp.float32)
    smooth = (1.0 - epsilon) * onehot + epsilon / num_classes
    return jnp.sum(jnp.mean(-smooth * log_probs, axis=0))


if __name__ == "__main__":
    epsilon = 0.1
    key = jax.random.PRNGKey(0)

    # Case 1: small batch, single tile (auto tile = whole batch).
    num_classes = 32
    B = 8
    k_logits, k_targets, key = jax.random.split(key, 3)
    logits = jax.random.normal(k_logits, (B, num_classes), dtype=jnp.float32)
    targets = jax.random.randint(k_targets, (B,), 0, num_classes, dtype=jnp.int32)
    loss = jax.block_until_ready(cross_entropy_label_smooth(
        logits, targets, num_classes=num_classes, epsilon=epsilon))
    ref = _reference(logits, targets, num_classes, epsilon)
    assert jnp.allclose(loss, ref, rtol=1e-5, atol=1e-5), (loss, ref)

    # Case 2: multi-tile, partial last tile, lane-sparse C (exercises the
    # masked last tile + Buffered(3) path).
    B2 = 20
    k_logits2, k_targets2, key = jax.random.split(key, 3)
    logits2 = jax.random.normal(k_logits2, (B2, num_classes), dtype=jnp.float32)
    targets2 = jax.random.randint(k_targets2, (B2,), 0, num_classes, dtype=jnp.int32)
    loss2 = jax.block_until_ready(cross_entropy_label_smooth(
        logits2, targets2, num_classes=num_classes, epsilon=epsilon, block_b=8))
    ref2 = _reference(logits2, targets2, num_classes, epsilon)
    assert jnp.allclose(loss2, ref2, rtol=1e-5, atol=1e-5), (loss2, ref2)

    # Case 3: bf16 logits, multi-tile with exact division (no mask path),
    # exercises the mixed-precision (bf16 max/select, f32 exp/accum) path.
    C3, B3 = 160, 24
    k_logits3, k_targets3, key = jax.random.split(key, 3)
    logits3 = jax.random.normal(k_logits3, (B3, C3), dtype=jnp.float32)
    logits3 = logits3.astype(jnp.bfloat16)
    targets3 = jax.random.randint(k_targets3, (B3,), 0, C3, dtype=jnp.int32)
    loss3 = jax.block_until_ready(cross_entropy_label_smooth(
        logits3, targets3, num_classes=C3, epsilon=epsilon, block_b=8))
    ref3 = _reference(logits3, targets3, C3, epsilon)
    assert jnp.allclose(loss3, ref3, rtol=2e-2, atol=2e-2), (loss3, ref3)

    # Case 4: medium batch -> auto chooser splits into 2 balanced tiles with a
    # partial last tile (exercises the even-tiling heuristic).
    B4 = 600
    k_logits4, k_targets4, key = jax.random.split(key, 3)
    logits4 = jax.random.normal(k_logits4, (B4, num_classes), dtype=jnp.float32)
    targets4 = jax.random.randint(k_targets4, (B4,), 0, num_classes, dtype=jnp.int32)
    loss4 = jax.block_until_ready(cross_entropy_label_smooth(
        logits4, targets4, num_classes=num_classes, epsilon=epsilon))
    ref4 = _reference(logits4, targets4, num_classes, epsilon)
    assert jnp.allclose(loss4, ref4, rtol=1e-5, atol=1e-5), (loss4, ref4)

    print("KERNEL_OK")
</pallas_src>

<mosaic_0001>
module attributes {stable_mosaic.version = 11 : i64} {
  func.func @_ce_label_smooth_kernel(%arg0: i32, %arg1: memref<8x32xf32, #tpu.memory_space<vmem>>, %arg2: memref<8x1xi32, #tpu.memory_space<vmem>>, %arg3: memref<1x128xf32, #tpu.memory_space<vmem>>) attributes {dimension_semantics = [#tpu.dimension_semantics<parallel>], iteration_bounds = array<i64: 1>, scalar_prefetch = 0 : i64, scratch_operands = 0 : i64, tpu.core_type = #tpu.core_type<tc>, window_params = [{transform_indices = @transform_0, window_bounds = array<i64: 8, 32>}, {transform_indices = @transform_1, window_bounds = array<i64: 8, 1>}, {transform_indices = @transform_2, window_bounds = array<i64: 1, 128>}]} {
    %c0 = arith.constant 0 : index
    %c0_0 = arith.constant 0 : index
    %0 = vector.load %arg1[%c0, %c0_0] : memref<8x32xf32, #tpu.memory_space<vmem>>, vector<8x32xf32>
    %c0_1 = arith.constant 0 : index
    %c0_2 = arith.constant 0 : index
    %1 = vector.load %arg2[%c0_1, %c0_2] : memref<8x1xi32, #tpu.memory_space<vmem>>, vector<8x1xi32>
    %cst = arith.constant dense<0xFF800000> : vector<8xf32>
    %2 = vector.multi_reduction <maximumf>, %0, %cst [1] : vector<8x32xf32> to vector<8xf32>
    %3 = vector.shape_cast %2 : vector<8xf32> to vector<8x1xf32>
    %4 = tpu.iota {dimensions = array<i32: 1>} : vector<8x32xi32>
    %5 = vector.broadcast %1 : vector<8x1xi32> to vector<8x32xi32>
    %6 = arith.cmpi eq, %4, %5 : vector<8x32xi32>
    %cst_3 = arith.constant 0.000000e+00 : f32
    %7 = vector.broadcast %cst_3 : f32 to vector<8x32xf32>
    %8 = arith.select %6, %0, %7 : vector<8x32xi1>, vector<8x32xf32>
    %cst_4 = arith.constant dense<0.000000e+00> : vector<8xf32>
    %9 = vector.multi_reduction <add>, %8, %cst_4 [1] : vector<8x32xf32> to vector<8xf32>
    %10 = vector.shape_cast %9 : vector<8xf32> to vector<8x1xf32>
    %cst_5 = arith.constant dense<0.000000e+00> : vector<8xf32>
    %11 = vector.multi_reduction <add>, %0, %cst_5 [1] : vector<8x32xf32> to vector<8xf32>
    %12 = vector.shape_cast %11 : vector<8xf32> to vector<8x1xf32>
    %13 = vector.broadcast %3 : vector<8x1xf32> to vector<8x32xf32>
    %14 = arith.subf %0, %13 : vector<8x32xf32>
    %15 = math.exp %14 : vector<8x32xf32>
    %cst_6 = arith.constant dense<0.000000e+00> : vector<8xf32>
    %16 = vector.multi_reduction <add>, %15, %cst_6 [1] : vector<8x32xf32> to vector<8xf32>
    %17 = vector.shape_cast %16 : vector<8xf32> to vector<8x1xf32>
    %18 = math.log %17 : vector<8x1xf32>
    %19 = arith.subf %10, %3 : vector<8x1xf32>
    %cst_7 = arith.constant 3.200000e+01 : f32
    %20 = vector.broadcast %cst_7 : f32 to vector<8x1xf32>
    %21 = arith.mulf %20, %3 : vector<8x1xf32>
    %22 = arith.subf %12, %21 : vector<8x1xf32>
    %23 = arith.subf %19, %18 : vector<8x1xf32>
    %cst_8 = arith.constant 0.899999976 : f32
    %24 = vector.broadcast %cst_8 : f32 to vector<8x1xf32>
    %25 = arith.mulf %24, %23 : vector<8x1xf32>
    %cst_9 = arith.constant 3.200000e+01 : f32
    %26 = vector.broadcast %cst_9 : f32 to vector<8x1xf32>
    %27 = arith.mulf %26, %18 : vector<8x1xf32>
    %28 = arith.subf %22, %27 : vector<8x1xf32>
    %cst_10 = arith.constant 3.125000e-03 : f32
    %29 = vector.broadcast %cst_10 : f32 to vector<8x1xf32>
    %30 = arith.mulf %29, %28 : vector<8x1xf32>
    %31 = arith.addf %25, %30 : vector<8x1xf32>
    %cst_11 = arith.constant 0.000000e+00 : f32
    %32 = vector.broadcast %cst_11 : f32 to vector<8x1xf32>
    %33 = arith.subf %32, %31 : vector<8x1xf32>
    %34 = vector.shape_cast %33 : vector<8x1xf32> to vector<1x8x1xf32>
    %cst_12 = arith.constant dense<0.000000e+00> : vector<1xf32>
    %35 = vector.multi_reduction <add>, %34, %cst_12 [1, 2] : vector<1x8x1xf32> to vector<1xf32>
    %36 = vector.shape_cast %35 : vector<1xf32> to vector<1x1x1xf32>
    %37 = vector.extract %36[0, 0, 0] : f32 from vector<1x1x1xf32>
    %38 = vector.broadcast %37 : f32 to vector<1x128xf32>
    %c0_13 = arith.constant 0 : index
    %c0_14 = arith.constant 0 : index
    %39 = vector.load %arg3[%c0_13, %c0_14] : memref<1x128xf32, #tpu.memory_space<vmem>>, vector<1x128xf32>
    tpu.vector_store %arg3[%c0_13, %c0_14], %38 {strides = array<i32>} : memref<1x128xf32, #tpu.memory_space<vmem>>, vector<1x128xf32>,
    return
  }
  func.func @transform_0(%arg0: i32) -> (i32, i32) {
    %c0_i32 = arith.constant 0 : i32
    %c0_i32_0 = arith.constant 0 : i32
    return %arg0, %c0_i32 : i32, i32
  }
  func.func @transform_1(%arg0: i32) -> (i32, i32) {
    %c0_i32 = arith.constant 0 : i32
    %c0_i32_0 = arith.constant 0 : i32
    return %arg0, %c0_i32 : i32, i32
  }
  func.func @transform_2(%arg0: i32) -> (i32, i32) {
    %c0_i32 = arith.constant 0 : i32
    %c0_i32_0 = arith.constant 0 : i32
    return %arg0, %c0_i32 : i32, i32
  }
}

</mosaic_0001>

<llo_original>
// kernel: tpu_custom_call.1
$region0: #{tpu_custom_call.1}
  #allocation0 [shape = 'u32[]', space=smem, size = 0x4, offset = 0x4, fixed_abs, tag = 'smem constant byte address 0x4 - core index']
  #allocation1 [shape = 'u32[144,128]{1,0:T(1,128)}', space=vmem, size = 0x12000, scoped, tag = 'internal scratch']
  %s0 = inlined_call_operand.vmem [shape: f32[8,32], index: 0, kind: input, shape index: {}]
  %s1 = inlined_call_operand.vmem [shape: s32[8,1], index: 1, kind: input, shape index: {}]
  %s2 = inlined_call_operand.hbm [shape: f32[1,128], index: 2, kind: output, shape index: {}]
  %s3 = sld [smem:[#allocation0]]
  $region18: #{tpu_custom_call.1} parent=0
    _
  %s5 = ssub.s32 1, %s3
  %s6 = scalar_select 0, %s5, %s3
  $region1: #{tpu_custom_call.1} parent=0
    #allocation2 [shape = 'u8[512]{0}', space=vmem, size = 0x400, scoped, tag = 'output window, operand 0, single buffered']
    #allocation3 [shape = 's32[1]{0}', space=sflag, size = 0x4, scoped, tag = 'scoped memory for tpu_custom_call.1']
    %7 = vsyncpa [#allocation3], 0
    // Predicated region
    $region2: #{tpu_custom_call.1} parent=1 // pred_check
      _
    $region3: #{tpu_custom_call.1} parent=1 // pred_check_branch
      %9 = sbr.rel (0) target = $region5
    $region4: #{tpu_custom_call.1} parent=1 // pred_region
      _
    $region5: #{tpu_custom_call.1} parent=1 // pred_fallthru
      _
    // Predicated region
    $region6: #{tpu_custom_call.1} parent=1 // pred_check
      _
    $region7: #{tpu_custom_call.1} parent=1 // pred_check_branch
      %11 = sbr.rel (0) target = $region9
    $region8: #{tpu_custom_call.1} parent=1 // pred_region
      _
    $region9: #{tpu_custom_call.1} parent=1 // pred_fallthru
      _
    %v12 = vld [vmem:[%s0] sm:$0xff]
    %v13 = vld [vmem:[%s1] sm:$0xff]
    %vm14 = vcmask 261120
    %v15 = vsel %vm14, %v12, -inf
    %16 = vmax.xlane.f32.xlu0 %v15
    %v17 = vpop.xlane.xlu0 %16
    %v18 = vlaneseq
    %v19 = vand.u32 %v18, 127
    %20 = vset.pattern.permute.xlu0 0
    %21 = vperm.xlu0 %20, %v13
    %v22 = vpop.permute.xlu0 %21
    %vm23 = vcmp.eq.s32.totalorder %v19, %v22
    %v24 = vsel %vm23, %v12, 0.0
    %v25 = vsel %vm14, %v24, 0.0
    %26 = vadd.xlane.f32.xlu0 %v25
    %v27 = vpop.xlane.xlu0 %26
    %v28 = vsel %vm14, %v12, 0.0
    %29 = vadd.xlane.f32.xlu0 %v28
    %v30 = vpop.xlane.xlu0 %29
    %v31 = vsub.f32 %v12, %v17
    %v32 = vmul.f32 %v31, 1.442695
    %v33 = vpow.pop %v32
    %v34 = vsel %vm14, %v33, 0.0
    %35 = vadd.xlane.f32.xlu0 %v34
    %v36 = vpop.xlane.xlu0 %35
    %v37 = vlog2.pop %v36
    %v38 = vmul.f32 %v37, 0.6931472
    %v39 = vsub.f32 %v27, %v17
    %v40 = vmul.f32 %v17, 32.0
    %v41 = vsub.f32 %v30, %v40
    %v42 = vsub.f32 %v39, %v38
    %v43 = vmul.f32 %v42, 0.9
    %v44 = vmul.f32 %v38, 32.0
    %v45 = vsub.f32 %v41, %v44
    %v46 = vmul.f32 %v45, 0.003125
    %v47 = vadd.f32 %v43, %v46
    %v48 = vsub.f32 0.0, %v47
    %vm49 = vcmask 7168
    %v50 = vsel %vm49, %v48, 0.0
    %51 = vadd.xlane.f32.xlu0 %v50
    %v52 = vpop.xlane.xlu0 %51
    %v53 = vrot.slane %v52, 4
    %v54 = vadd.f32 %v52, %v53
    %v55 = vrot.slane %v54, 2
    %v56 = vadd.f32 %v54, %v55
    %v57 = vrot.slane %v56, 1
    %v58 = vadd.f32 %v56, %v57
    %s59 = vtos %v58
    %v60 = vstv %s59
    %61 = vst [vmem:[#allocation2] sm:$0x1] %v60
    // Predicated region
    $region10: #{tpu_custom_call.1} parent=1 // pred_check
      _
    $region11: #{tpu_custom_call.1} parent=1 // pred_check_branch
      %63 = sbr.rel (0) target = $region13
    $region12: #{tpu_custom_call.1} parent=1 // pred_region
      %s65 = ssub.s32 16, 16
      %66 = vsyncadd [#allocation3], %s65
      %s68 = sshll.u32 [#allocation2], 4
      %s69 = int_to_ptr.vmem [resolvable:$true] %s68
      %71 = dma.vmem_to_hbm [thread:$0]  %s69, 16, %s2, [#allocation3]
    $region13: #{tpu_custom_call.1} parent=1 // pred_fallthru
      _
    // Predicated region
    $region14: #{tpu_custom_call.1} parent=1 // pred_check
      _
    $region15: #{tpu_custom_call.1} parent=1 // pred_check_branch
      %73 = sbr.rel (0) target = $region17
    $region16: #{tpu_custom_call.1} parent=1 // pred_region
      %74 = dma.done [#allocation3], 16
    $region17: #{tpu_custom_call.1} parent=1 // pred_fallthru
      _
    %75 = vsyncpa [#allocation3], 1

</llo_original>
